<compile_context>
chip_gen: v6e
topology: v6e:2x2x1
jax: 0.10.0
libtpu: 0.0.40
codegen_flags: <defaults>
</compile_context>

<pallas_src>
import functools

import jax
import jax.numpy as jnp
from jax.experimental import pallas as pl
from jax.experimental.pallas import tpu as pltpu

LANE = 128


def _round_up(x, m):
    return ((x + m - 1) // m) * m


@functools.lru_cache(maxsize=1)
def _vmem_limit_bytes():
    # Per-generation VMEM budget with headroom: ~48 MiB on v7x (64 MiB/TC), ~96 MiB on v5e/v6e.
    try:
        cap = int(pltpu.get_tpu_info().vmem_capacity_bytes)
        return max(32 * 1024 * 1024, (cap * 3) // 4)
    except Exception:
        return 48 * 1024 * 1024


def _pad2d(x, rows, cols, dtype=None):
    dt = x.dtype if dtype is None else dtype
    out = jnp.zeros((rows, cols), dt)
    return out.at[: x.shape[0], : x.shape[1]].set(x.astype(dt))


def _node_pad(n):
    """Padded node count so that both dst/src tiles below divide it."""
    if n >= 2048:
        return _round_up(n, 2048)
    return _round_up(max(n, 1), LANE)


def _tiles_for(n_pad):
    """(dst_row_tile, src_reduction_tile) for a node type with n_pad padded rows.

    The dst axis always gets >= 2 tiles so dimension_semantics=('parallel', ...) can use both
    TensorCores on v7x; tiles cap at 1024 (fits comfortably in VMEM double-buffered).
    """
    if n_pad >= 2048:
        return 1024, 1024
    return max(n_pad // 2, 8), n_pad  # n_pad is a multiple of 128 -> dst tile multiple of 64


# ---------------------------------------------------------------------------
# Pallas kernels
# ---------------------------------------------------------------------------
def _sage_layer_kernel(a_ref, invd_ref, xs_ref, xd_ref, wl_ref, bl_ref, wr_ref,
                       o_ref, acc_ref):
    k = pl.program_id(1)

    @pl.when(k == 0)
    def _():
        acc_ref[...] = jnp.zeros_like(acc_ref)

    # int8 neighbor-count adjacency stream (half the HBM bytes of bf16); cast via f32 to bf16
    # (well-supported convert path) and run a bf16 MXU matmul with f32 accumulation.
    a_bf16 = a_ref[...].astype(jnp.float32).astype(jnp.bfloat16)
    acc_ref[...] += jnp.dot(a_bf16, xs_ref[...], preferred_element_type=jnp.float32)

    @pl.when(k == pl.num_programs(1) - 1)
    def _():
        # exact mean aggregation: integer neighbor sums scaled once by f32 1/deg
        agg = acc_ref[...] * invd_ref[...]
        # SAGEConv: lin_l(mean_j x_j) + lin_r(x_i)   (lin_l carries the bias). f32 epilogue.
        h = (jnp.dot(agg, wl_ref[...], preferred_element_type=jnp.float32)
             + jnp.dot(xd_ref[...].astype(jnp.float32), wr_ref[...],
                       preferred_element_type=jnp.float32)
             + bl_ref[...])
        # normalize=True -> F.normalize row-wise (x / max(||x||, 1e-12)) via rsqrt (EUP slot)
        ss = jnp.sum(h * h, axis=-1, keepdims=True)
        h = h * jax.lax.rsqrt(jnp.maximum(ss, 1e-24))
        o_ref[...] = jnp.maximum(h, 0.0).astype(o_ref.dtype)  # encoder .relu(), bf16 store


def sage_layer(adj_cnt, inv_deg, x_src, x_dst, w_l, b_l, w_r, *, tm, tk):
    """adj_cnt: (n_dst_pad, n_src_pad) int8 counts; inv_deg: (n_dst_pad, 1) f32;
    x_*: bf16 lane-padded features; weights f32 lane-padded. Returns bf16 (n_dst_pad, h_pad)."""
    n_dst, n_src = adj_cnt.shape
    f_src = x_src.shape[1]
    f_dst = x_dst.shape[1]
    h_pad = w_l.shape[1]
    assert n_dst % tm == 0 and n_src % tk == 0
    grid = (n_dst // tm, n_src // tk)

    cost = pl.CostEstimate(
        flops=int(2 * n_dst * n_src * f_src + 2 * n_dst * (f_src + f_dst) * h_pad),
        transcendentals=int(n_dst),
        bytes_accessed=int(adj_cnt.size                       # int8 A stream
                           + inv_deg.size * 4
                           + x_src.size * 2 * grid[0]         # X_src re-streamed per dst tile
                           + x_dst.size * 2
                           + n_dst * h_pad * 2),               # bf16 output
    )

    return pl.pallas_call(
        _sage_layer_kernel,
        out_shape=jax.ShapeDtypeStruct((n_dst, h_pad), jnp.bfloat16),
        grid_spec=pltpu.PrefetchScalarGridSpec(
            num_scalar_prefetch=0,
            grid=grid,
            in_specs=[
                pl.BlockSpec((tm, tk), lambda i, k: (i, k)),          # A counts (int8)
                pl.BlockSpec((tm, 1), lambda i, k: (i, 0)),           # 1/deg (f32)
                pl.BlockSpec((tk, f_src), lambda i, k: (k, 0)),       # X_src (bf16)
                pl.BlockSpec((tm, f_dst), lambda i, k: (i, 0)),       # X_dst (bf16)
                pl.BlockSpec((f_src, h_pad), lambda i, k: (0, 0)),    # W_l (f32, resident)
                pl.BlockSpec((1, h_pad), lambda i, k: (0, 0)),        # b_l (f32)
                pl.BlockSpec((f_dst, h_pad), lambda i, k: (0, 0)),    # W_r (f32, resident)
            ],
            out_specs=pl.BlockSpec((tm, h_pad), lambda i, k: (i, 0)),
            scratch_shapes=[pltpu.VMEM((tm, f_src), jnp.float32)],
        ),
        compiler_params=pltpu.CompilerParams(
            dimension_semantics=("parallel", "arbitrary"),
            vmem_limit_bytes=_vmem_limit_bytes(),
        ),
        cost_estimate=cost,
    )(adj_cnt, inv_deg, x_src, x_dst, w_l, b_l, w_r)


def _decoder_kernel(zc_ref, zr_ref, w1c_ref, w1r_ref, b1_ref, w2_ref, b2_ref, o_ref):
    # lin1 on the (never materialized) concat: z_c @ W1[:H] + z_r @ W1[H:]   (bf16 MXU, f32 acc)
    h = (jnp.dot(zc_ref[...], w1c_ref[...], preferred_element_type=jnp.float32)
         + jnp.dot(zr_ref[...], w1r_ref[...], preferred_element_type=jnp.float32)
         + b1_ref[...])
    h = jnp.maximum(h, 0.0)                                   # lin1(z).relu()
    # lin2 (hidden -> 1) as VPU multiply + lane reduce; narrow (te, 1) column store.
    logit = jnp.sum(h * w2_ref[...], axis=-1, keepdims=True)  # (te, 1)
    o_ref[...] = logit + b2_ref[...]


def edge_decoder(zc, zr, w1c, w1r, b1, w2, b2, n_edges, *, te):
    e_pad = zc.shape[0]
    h_pad = zc.shape[1]
    out = pl.pallas_call(
        _decoder_kernel,
        out_shape=jax.ShapeDtypeStruct((e_pad, 1), jnp.float32),
        grid_spec=pltpu.PrefetchScalarGridSpec(
            num_scalar_prefetch=0,
            grid=(e_pad // te,),
            in_specs=[
                pl.BlockSpec((te, h_pad), lambda i: (i, 0)),          # z_customer rows (bf16)
                pl.BlockSpec((te, h_pad), lambda i: (i, 0)),          # z_recipe rows (bf16)
                pl.BlockSpec((h_pad, h_pad), lambda i: (0, 0)),       # W1[:H] (bf16)
                pl.BlockSpec((h_pad, h_pad), lambda i: (0, 0)),       # W1[H:] (bf16)
                pl.BlockSpec((1, h_pad), lambda i: (0, 0)),           # b1 (f32)
                pl.BlockSpec((1, h_pad), lambda i: (0, 0)),           # w2 row (f32)
                pl.BlockSpec((1, 1), lambda i: (0, 0)),               # b2 scalar (f32)
            ],
            out_specs=pl.BlockSpec((te, 1), lambda i: (i, 0)),
        ),
        compiler_params=pltpu.CompilerParams(
            dimension_semantics=("parallel",),
            vmem_limit_bytes=_vmem_limit_bytes(),
        ),
    )(zc, zr, w1c, w1r, b1, w2, b2)
    return out[:n_edges, 0]                                   # z.view(-1)


# ---------------------------------------------------------------------------
# Glue: graph -> int8 count adjacency + inv-degree, parameters, forward pass
# ---------------------------------------------------------------------------
def count_adjacency(edge_index, n_src_pad, n_dst_pad):
    """A[dst, src] = #edges src->dst as int8, plus f32 1/deg(dst); then
    (A @ X_src) * inv_deg == scatter-mean of neighbor features (exact)."""
    src, dst = edge_index
    counts = jnp.zeros((n_dst_pad, n_src_pad), jnp.int32).at[dst, src].add(1)
    deg = counts.sum(axis=1, keepdims=True).astype(jnp.float32)
    inv_deg = 1.0 / jnp.maximum(deg, 1.0)
    # TODO(synk): counts > 127 (very heavy multi-edges) would overflow int8 storage.
    return counts.astype(jnp.int8), inv_deg


def _linear(key, fan_in, fan_out):
    # deterministic torch.nn.Linear-style init (uniform +/- 1/sqrt(fan_in))
    k_w, k_b = jax.random.split(key)
    bound = 1.0 / float(fan_in) ** 0.5
    w = jax.random.uniform(k_w, (fan_in, fan_out), jnp.float32, -bound, bound)
    b = jax.random.uniform(k_b, (fan_out,), jnp.float32, -bound, bound)
    return w, b


def _sage_params(key, f_src, f_dst, hidden, f_src_pad, f_dst_pad, h_pad):
    k_l, k_r = jax.random.split(key)
    w_l, b_l = _linear(k_l, f_src, hidden)     # lin_l (with bias) on aggregated neighbors
    w_r, _ = _linear(k_r, f_dst, hidden)       # lin_r (no bias in PyG SAGEConv) on root
    return (_pad2d(w_l, f_src_pad, h_pad),                    # f32 resident (tiny)
            _pad2d(b_l.reshape(1, -1), 1, h_pad),
            _pad2d(w_r, f_dst_pad, h_pad))


def make_params(key, f_customer, f_recipe, hidden):
    f_c_pad = _round_up(f_customer, LANE)
    f_r_pad = _round_up(f_recipe, LANE)
    h_pad = _round_up(hidden, LANE)
    keys = jax.random.split(key, 6)
    params = {
        # conv1, per edge type created by to_hetero
        'conv1_rc': _sage_params(keys[0], f_recipe, f_customer, hidden, f_r_pad, f_c_pad, h_pad),
        'conv1_cr': _sage_params(keys[1], f_customer, f_recipe, hidden, f_c_pad, f_r_pad, h_pad),
        # conv2 (hidden -> hidden)
        'conv2_rc': _sage_params(keys[2], hidden, hidden, hidden, h_pad, h_pad, h_pad),
        'conv2_cr': _sage_params(keys[3], hidden, hidden, hidden, h_pad, h_pad, h_pad),
    }
    # EdgeDecoder. NOTE: the original script constructs EdgeDecoder(hidden) whose lin1 would
    # mismatch the CONCAT embedding (2*hidden); we size lin1 for 2*hidden and split it so the
    # concat never has to be materialized.
    # TODO(synk): original EdgeDecoder(hidden_channels) is shape-inconsistent with CONCAT.
    w1, b1 = _linear(keys[4], 2 * hidden, hidden)
    w2, b2 = _linear(keys[5], hidden, 1)
    params['dec'] = (
        _pad2d(w1[:hidden], h_pad, h_pad, jnp.bfloat16),      # W1c (bf16 for the MXU)
        _pad2d(w1[hidden:], h_pad, h_pad, jnp.bfloat16),      # W1r
        _pad2d(b1.reshape(1, -1), 1, h_pad),                  # b1 (f32)
        _pad2d(w2.T, 1, h_pad),                               # w2 row (f32)
        jnp.full((1, 1), b2[0], jnp.float32),                 # b2 scalar
    )
    return params


def model_forward(params, x_dict, edge_index_dict, edge_label_index):
    x_c, x_r = x_dict['customer'], x_dict['recipe']
    n_c, n_r = x_c.shape[0], x_r.shape[0]
    n_c_pad, n_r_pad = _node_pad(n_c), _node_pad(n_r)
    tm_c, tk_c = _tiles_for(n_c_pad)     # customer axis: (dst-row tile, src-reduction tile)
    tm_r, tk_r = _tiles_for(n_r_pad)
    f_c_pad = _round_up(x_c.shape[1], LANE)
    f_r_pad = _round_up(x_r.shape[1], LANE)

    # lane-pad raw features once; bf16 operands for the MXU
    x_c_p = _pad2d(x_c, n_c_pad, f_c_pad, jnp.bfloat16)
    x_r_p = _pad2d(x_r, n_r_pad, f_r_pad, jnp.bfloat16)

    ei_cr = edge_index_dict[('customer', 'buys', 'recipe')]
    ei_rc = edge_index_dict[('recipe', 'rev_buys', 'customer')]
    # TODO(synk): dense adjacency is O(n_dst*n_src); a segment-sum formulation would be needed
    # for very large graphs (design change, not a kernel issue).
    adj_r_from_c, invd_r = count_adjacency(ei_cr, n_c_pad, n_r_pad)   # recipe   <- customer
    adj_c_from_r, invd_c = count_adjacency(ei_rc, n_r_pad, n_c_pad)   # customer <- recipe

    # encoder: conv1 (mean-agg + lin_l + lin_r + L2-norm + relu fused in kernel)
    z_c = sage_layer(adj_c_from_r, invd_c, x_r_p, x_c_p, *params['conv1_rc'], tm=tm_c, tk=tk_r)
    z_r = sage_layer(adj_r_from_c, invd_r, x_c_p, x_r_p, *params['conv1_cr'], tm=tm_r, tk=tk_c)
    # encoder: conv2 — layer outputs are already bf16, no extra cast pass
    z_c2 = sage_layer(adj_c_from_r, invd_c, z_r, z_c, *params['conv2_rc'], tm=tm_c, tk=tk_r)
    z_r2 = sage_layer(adj_r_from_c, invd_r, z_c, z_r, *params['conv2_cr'], tm=tm_r, tk=tk_c)

    # combine_embeddings, CONCAT mode: XLA row gather with pre-padded indices (no extra copy);
    # the concat itself is fused away inside the decoder by splitting lin1's weight.
    # TODO(synk): the gather could be fused into the decoder with a manual DMA gather.
    row, col = edge_label_index
    e = int(row.shape[0])
    if e >= LANE:
        te = LANE
        e_pad = _round_up(e, te)
    else:
        e_pad = _round_up(e, 8)
        te = e_pad
    row_p = jnp.zeros((e_pad,), jnp.int32).at[:e].set(row.astype(jnp.int32))
    col_p = jnp.zeros((e_pad,), jnp.int32).at[:e].set(col.astype(jnp.int32))
    zc_g = jnp.take(z_c2, row_p, axis=0)      # (e_pad, h_pad) bf16
    zr_g = jnp.take(z_r2, col_p, axis=0)

    # EdgeDecoder (tiled over E, narrow (E_pad, 1) logit column, sliced to (E,))
    return edge_decoder(zc_g, zr_g, *params['dec'], e, te=te)


# ---------------------------------------------------------------------------
if __name__ == "__main__":
    key = jax.random.PRNGKey(0)
    kx1, kx2, ke1, ke2, kl1, kl2, kp = jax.random.split(key, 7)

    n_customer, n_recipe = 16, 24
    f_customer, f_recipe = 8, 12
    hidden = 32
    n_edges, n_labels = 64, 10

    x_dict = {
        'customer': jax.random.normal(kx1, (n_customer, f_customer), jnp.float32),
        'recipe': jax.random.normal(kx2, (n_recipe, f_recipe), jnp.float32),
    }
    cust_idx = jax.random.randint(ke1, (n_edges,), 0, n_customer)
    rec_idx = jax.random.randint(ke2, (n_edges,), 0, n_recipe)
    edge_index_dict = {
        ('customer', 'buys', 'recipe'): jnp.stack([cust_idx, rec_idx]),
        ('recipe', 'rev_buys', 'customer'): jnp.stack([rec_idx, cust_idx]),
    }
    edge_label_index = jnp.stack([
        jax.random.randint(kl1, (n_labels,), 0, n_customer),
        jax.random.randint(kl2, (n_labels,), 0, n_recipe),
    ])

    params = make_params(kp, f_customer, f_recipe, hidden)

    out = model_forward(params, x_dict, edge_index_dict, edge_label_index)
    out = jax.block_until_ready(out)
    assert out.shape == (n_labels,), out.shape
    assert bool(jnp.all(jnp.isfinite(out)))
    print("KERNEL_OK")
</pallas_src>

<mosaic_0001>
module attributes {stable_mosaic.version = 11 : i64} {
  func.func @_sage_layer_kernel(%arg0: i32, %arg1: i32, %arg2: memref<64x128xi8, #tpu.memory_space<vmem>>, %arg3: memref<64x1xf32, #tpu.memory_space<vmem>>, %arg4: memref<128x128xbf16, #tpu.memory_space<vmem>>, %arg5: memref<64x128xbf16, #tpu.memory_space<vmem>>, %arg6: memref<128x128xf32, #tpu.memory_space<vmem>>, %arg7: memref<1x128xf32, #tpu.memory_space<vmem>>, %arg8: memref<128x128xf32, #tpu.memory_space<vmem>>, %arg9: memref<64x128xbf16, #tpu.memory_space<vmem>>, %arg10: memref<64x128xf32, #tpu.memory_space<vmem>>) attributes {dimension_semantics = [#tpu.dimension_semantics<parallel>, #tpu.dimension_semantics<arbitrary>], iteration_bounds = array<i64: 2, 1>, scalar_prefetch = 0 : i64, scratch_operands = 1 : i64, tpu.core_type = #tpu.core_type<tc>, window_params = [{transform_indices = @transform_0, window_bounds = array<i64: 64, 128>}, {transform_indices = @transform_1, window_bounds = array<i64: 64, 1>}, {transform_indices = @transform_2, window_bounds = array<i64: 128, 128>}, {transform_indices = @transform_3, window_bounds = array<i64: 64, 128>}, {pipeline_mode = #tpu.pipeline_mode<synchronous>, transform_indices = @transform_4, window_bounds = array<i64: 128, 128>}, {pipeline_mode = #tpu.pipeline_mode<synchronous>, transform_indices = @transform_5, window_bounds = array<i64: 1, 128>}, {pipeline_mode = #tpu.pipeline_mode<synchronous>, transform_indices = @transform_6, window_bounds = array<i64: 128, 128>}, {transform_indices = @transform_7, window_bounds = array<i64: 64, 128>}]} {
    %c0_i32 = arith.constant 0 : i32
    %0 = arith.cmpi eq, %arg1, %c0_i32 : i32
    %1 = arith.extui %0 : i1 to i32
    %c0_i32_0 = arith.constant 0 : i32
    %2 = arith.cmpi ne, %1, %c0_i32_0 : i32
    scf.if %2 {
      %cst_10 = arith.constant 0.000000e+00 : f32
      %14 = vector.broadcast %cst_10 : f32 to vector<64x128xf32>
      %c0_11 = arith.constant 0 : index
      %c0_12 = arith.constant 0 : index
      %15 = vector.load %arg10[%c0_11, %c0_12] : memref<64x128xf32, #tpu.memory_space<vmem>>, vector<64x128xf32>
      tpu.vector_store %arg10[%c0_11, %c0_12], %14 {strides = array<i32>} : memref<64x128xf32, #tpu.memory_space<vmem>>, vector<64x128xf32>,
    } else {
    }
    %c0 = arith.constant 0 : index
    %c0_1 = arith.constant 0 : index
    %3 = vector.load %arg2[%c0, %c0_1] : memref<64x128xi8, #tpu.memory_space<vmem>>, vector<64x128xi8>
    %4 = arith.sitofp %3 : vector<64x128xi8> to vector<64x128xf32>
    %5 = arith.truncf %4 : vector<64x128xf32> to vector<64x128xbf16>
    %c0_2 = arith.constant 0 : index
    %c0_3 = arith.constant 0 : index
    %6 = vector.load %arg10[%c0_2, %c0_3] : memref<64x128xf32, #tpu.memory_space<vmem>>, vector<64x128xf32>
    %c0_4 = arith.constant 0 : index
    %c0_5 = arith.constant 0 : index
    %7 = vector.load %arg4[%c0_4, %c0_5] : memref<128x128xbf16, #tpu.memory_space<vmem>>, vector<128x128xbf16>
    %cst = arith.constant dense<0.000000e+00> : vector<64x128xf32>
    %8 = tpu.matmul %5, %7, %cst {dimension_numbers = #tpu.dot_dimension_numbers<[1], [0], [0], [1], [0, 0, 1, 1], [], []>} : vector<64x128xbf16>, vector<128x128xbf16>, vector<64x128xf32> -> vector<64x128xf32>
    %9 = arith.addf %6, %8 : vector<64x128xf32>
    %c0_6 = arith.constant 0 : index
    %c0_7 = arith.constant 0 : index
    %10 = vector.load %arg10[%c0_6, %c0_7] : memref<64x128xf32, #tpu.memory_space<vmem>>, vector<64x128xf32>
    tpu.vector_store %arg10[%c0_6, %c0_7], %9 {strides = array<i32>} : memref<64x128xf32, #tpu.memory_space<vmem>>, vector<64x128xf32>,
    %c0_i32_8 = arith.constant 0 : i32
    %11 = arith.cmpi eq, %arg1, %c0_i32_8 : i32
    %12 = arith.extui %11 : i1 to i32
    %c0_i32_9 = arith.constant 0 : i32
    %13 = arith.cmpi ne, %12, %c0_i32_9 : i32
    scf.if %13 {
      %c0_10 = arith.constant 0 : index
      %c0_11 = arith.constant 0 : index
      %14 = vector.load %arg10[%c0_10, %c0_11] : memref<64x128xf32, #tpu.memory_space<vmem>>, vector<64x128xf32>
      %c0_12 = arith.constant 0 : index
      %c0_13 = arith.constant 0 : index
      %15 = vector.load %arg3[%c0_12, %c0_13] : memref<64x1xf32, #tpu.memory_space<vmem>>, vector<64x1xf32>
      %16 = vector.broadcast %15 : vector<64x1xf32> to vector<64x128xf32>
      %17 = arith.mulf %14, %16 : vector<64x128xf32>
      %c0_14 = arith.constant 0 : index
      %c0_15 = arith.constant 0 : index
      %18 = vector.load %arg6[%c0_14, %c0_15] : memref<128x128xf32, #tpu.memory_space<vmem>>, vector<128x128xf32>
      %cst_16 = arith.constant dense<0.000000e+00> : vector<64x128xf32>
      %19 = tpu.matmul %17, %18, %cst_16 {dimension_numbers = #tpu.dot_dimension_numbers<[1], [0], [0], [1], [0, 0, 1, 1], [], []>} : vector<64x128xf32>, vector<128x128xf32>, vector<64x128xf32> -> vector<64x128xf32>
      %c0_17 = arith.constant 0 : index
      %c0_18 = arith.constant 0 : index
      %20 = vector.load %arg5[%c0_17, %c0_18] : memref<64x128xbf16, #tpu.memory_space<vmem>>, vector<64x128xbf16>
      %21 = arith.extf %20 : vector<64x128xbf16> to vector<64x128xf32>
      %c0_19 = arith.constant 0 : index
      %c0_20 = arith.constant 0 : index
      %22 = vector.load %arg8[%c0_19, %c0_20] : memref<128x128xf32, #tpu.memory_space<vmem>>, vector<128x128xf32>
      %cst_21 = arith.constant dense<0.000000e+00> : vector<64x128xf32>
      %23 = tpu.matmul %21, %22, %cst_21 {dimension_numbers = #tpu.dot_dimension_numbers<[1], [0], [0], [1], [0, 0, 1, 1], [], []>} : vector<64x128xf32>, vector<128x128xf32>, vector<64x128xf32> -> vector<64x128xf32>
      %24 = arith.addf %19, %23 : vector<64x128xf32>
      %c0_22 = arith.constant 0 : index
      %c0_23 = arith.constant 0 : index
      %25 = vector.load %arg7[%c0_22, %c0_23] : memref<1x128xf32, #tpu.memory_space<vmem>>, vector<1x128xf32>
      %26 = vector.broadcast %25 : vector<1x128xf32> to vector<64x128xf32>
      %27 = arith.addf %24, %26 : vector<64x128xf32>
      %28 = arith.mulf %27, %27 : vector<64x128xf32>
      %cst_24 = arith.constant dense<0.000000e+00> : vector<64xf32>
      %29 = vector.multi_reduction <add>, %28, %cst_24 [1] : vector<64x128xf32> to vector<64xf32>
      %30 = vector.shape_cast %29 : vector<64xf32> to vector<64x1xf32>
      %cst_25 = arith.constant 1.000000e-24 : f32
      %31 = vector.broadcast %cst_25 : f32 to vector<64x1xf32>
      %32 = arith.maximumf %30, %31 : vector<64x1xf32>
      %33 = math.rsqrt %32 : vector<64x1xf32>
      %34 = vector.broadcast %33 : vector<64x1xf32> to vector<64x128xf32>
      %35 = arith.mulf %27, %34 : vector<64x128xf32>
      %cst_26 = arith.constant 0.000000e+00 : f32
      %36 = vector.broadcast %cst_26 : f32 to vector<64x128xf32>
      %37 = arith.maximumf %35, %36 : vector<64x128xf32>
      %38 = arith.truncf %37 : vector<64x128xf32> to vector<64x128xbf16>
      %c0_27 = arith.constant 0 : index
      %c0_28 = arith.constant 0 : index
      %39 = vector.load %arg9[%c0_27, %c0_28] : memref<64x128xbf16, #tpu.memory_space<vmem>>, vector<64x128xbf16>
      tpu.vector_store %arg9[%c0_27, %c0_28], %38 {strides = array<i32>} : memref<64x128xbf16, #tpu.memory_space<vmem>>, vector<64x128xbf16>,
    } else {
    }
    return
  }
  func.func @transform_0(%arg0: i32, %arg1: i32) -> (i32, i32) {
    %c0_i32 = arith.constant 0 : i32
    return %arg0, %arg1 : i32, i32
  }
  func.func @transform_1(%arg0: i32, %arg1: i32) -> (i32, i32) {
    %c0_i32 = arith.constant 0 : i32
    %c0_i32_0 = arith.constant 0 : i32
    return %arg0, %c0_i32 : i32, i32
  }
  func.func @transform_2(%arg0: i32, %arg1: i32) -> (i32, i32) {
    %c0_i32 = arith.constant 0 : i32
    %c0_i32_0 = arith.constant 0 : i32
    return %arg1, %c0_i32 : i32, i32
  }
  func.func @transform_3(%arg0: i32, %arg1: i32) -> (i32, i32) {
    %c0_i32 = arith.constant 0 : i32
    %c0_i32_0 = arith.constant 0 : i32
    return %arg0, %c0_i32 : i32, i32
  }
  func.func @transform_4(%arg0: i32, %arg1: i32) -> (i32, i32) {
    %c0_i32 = arith.constant 0 : i32
    %c0_i32_0 = arith.constant 0 : i32
    %c0_i32_1 = arith.constant 0 : i32
    return %c0_i32, %c0_i32_0 : i32, i32
  }
  func.func @transform_5(%arg0: i32, %arg1: i32) -> (i32, i32) {
    %c0_i32 = arith.constant 0 : i32
    %c0_i32_0 = arith.constant 0 : i32
    %c0_i32_1 = arith.constant 0 : i32
    return %c0_i32, %c0_i32_0 : i32, i32
  }
  func.func @transform_6(%arg0: i32, %arg1: i32) -> (i32, i32) {
    %c0_i32 = arith.constant 0 : i32
    %c0_i32_0 = arith.constant 0 : i32
    %c0_i32_1 = arith.constant 0 : i32
    return %c0_i32, %c0_i32_0 : i32, i32
  }
  func.func @transform_7(%arg0: i32, %arg1: i32) -> (i32, i32) {
    %c0_i32 = arith.constant 0 : i32
    %c0_i32_0 = arith.constant 0 : i32
    return %arg0, %c0_i32 : i32, i32
  }
}

</mosaic_0001>

<llo_original>
// kernel: tpu_custom_call.1
$region0: #{tpu_custom_call.1}
  #allocation0 [shape = 'u32[]', space=smem, size = 0x4, offset = 0x4, fixed_abs, tag = 'smem constant byte address 0x4 - core index']
  #allocation1 [shape = 'u32[144,128]{1,0:T(1,128)}', space=vmem, size = 0x12000, scoped, tag = 'internal scratch']
  #allocation2 [shape = 'f32[64,128]{1,0:T(8,128)}', space=vmem, size = 0x8000, scoped, tag = 'scratch operand']
  %s0 = inlined_call_operand.hbm [shape: s8[128,128], index: 0, kind: input, shape index: {}]
  %s1 = inlined_call_operand.vmem [shape: f32[128,1], index: 1, kind: input, shape index: {}]
  %s2 = inlined_call_operand.hbm [shape: bf16[128,128], index: 2, kind: input, shape index: {}]
  %s3 = inlined_call_operand.hbm [shape: bf16[128,128], index: 3, kind: input, shape index: {}]
  %s4 = inlined_call_operand.vmem [shape: f32[128,128], index: 4, kind: input, shape index: {}]
  %s5 = inlined_call_operand.vmem [shape: f32[1,128], index: 5, kind: input, shape index: {}]
  %s6 = inlined_call_operand.hbm [shape: f32[128,128], index: 6, kind: input, shape index: {}]
  %s7 = inlined_call_operand.hbm [shape: bf16[128,128], index: 7, kind: output, shape index: {}]
  %s8 = sld [smem:[#allocation0]]
  $region85: #{tpu_custom_call.1} parent=0
    _
  %s10 = ssub.s32 1, %s8
  %s11 = scalar_select 0, %s10, %s8
  $region1: #{tpu_custom_call.1} parent=0
    #allocation3 [shape = 'u8[16384]{0}', space=vmem, size = 0x4000, scoped, tag = 'input window, operand 0']
    #allocation4 [shape = 's32[2]{0}', space=sflag, size = 0x8, scoped, tag = 'scoped memory for tpu_custom_call.1']
    #allocation5 [shape = 's32[2]{0}', space=sflag, size = 0x8, scoped, tag = 'scoped memory for tpu_custom_call.1']
    #allocation6 [shape = 'u8[32768]{0}', space=vmem, size = 0x8000, scoped, tag = 'input window, operand 2, single buffered']
    #allocation7 [shape = 's32[1]{0}', space=sflag, size = 0x4, scoped, tag = 'scoped memory for tpu_custom_call.1']
    #allocation8 [shape = 'u8[32768]{0}', space=vmem, size = 0x8000, scoped, tag = 'input window, operand 3']
    #allocation9 [shape = 'u8[65536]{0}', space=vmem, size = 0x10000, scoped, tag = 'input window, operand 6, single buffered']
    #allocation10 [shape = 'u8[32768]{0}', space=vmem, size = 0x8000, scoped, tag = 'output window, operand 0']
    %12 = vsyncpa [#allocation4], 0
    %s13 = scalar_lea.sflag [#allocation4], 1
    %14 = vsyncpa %s13, 0
    %15 = vsyncpa [#allocation7], 0
    %16 = vsyncpa [#allocation5], 0
    %s17 = scalar_lea.sflag [#allocation5], 1
    %18 = vsyncpa %s17, 0
    loop: start=0, step=1, limit=4
    $region2: #{tpu_custom_call.1} parent=1 // loop_pre_header
      _
    $region3: #{tpu_custom_call.1} parent=1 // loop_header
      %s20 = sphi 0, %s24
      %p21 = scmp.ge.s32.totalorder %s20, 4
      %s27 = sphi 0, %s39
      %s28 = sphi 0, %s35
      %s29 = sphi 0, %s27
      %s30 = sphi 0, %s28
      %s31 = sphi 0, %s29
      %s32 = sphi 0, %s30
      %s44 = sphi 0, %s46
      %s47 = sphi 0, %s44
      %s48 = sphi 0, %s47
      %s64 = sphi 0, %s48
      %s70 = sphi 0, %s72
      %s73 = sphi 0, %s70
      %s74 = sphi 0, %s73
      %s90 = sphi 0, %s74
      %s96 = sphi 0, %s98
      %s99 = sphi 0, %s96
      %s100 = sphi 0, %s99
      %s116 = sphi 0, %s100
      %s122 = sphi 0, %s124
      %s125 = sphi 0, %s122
      %s126 = sphi 0, %s125
      %s142 = sphi 0, %s126
      %s146 = sphi 0, %s146
      %s148 = sphi 0, %s146
      %s149 = sphi 0, %s148
      %s163 = sphi 0, %s149
      %s167 = sphi 0, %s167
      %s169 = sphi 0, %s167
      %s170 = sphi 0, %s169
      %s184 = sphi 0, %s170
      %s188 = sphi 0, %s188
      %s190 = sphi 0, %s188
      %s191 = sphi 0, %s190
      %s205 = sphi 0, %s191
      %s211 = sphi 0, %s213
      %s214 = sphi 0, %s211
      %s215 = sphi 0, %s214
      %s231 = sphi 0, %s215
    $region4: #{tpu_custom_call.1} parent=1 // loop_header_branch
      %23 = sbr.rel (%p21) target = $region8
    $region5: #{tpu_custom_call.1} parent=1 // loop_body
      %s25 = ssub.s32 %s20, 1
      %s26 = ssub.s32 %s20, 2
      %s33 = sadd.s32 1, %s28
      %p34 = scmp.ge.s32.totalorder %s33, 1
      %s35 = scalar_select %p34, 0, %s33
      %s36 = sadd.s32 1, %s27
      %s37 = scalar_select %p34, %s36, %s27
      %p38 = scmp.ge.s32.totalorder %s37, 2
      %s39 = scalar_select %p38, 0, %s37
      %s40 = ssub.s32 %s27, %s39
      %s41 = ssub.s32 %s28, %s35
      %s42 = sor.u32 %s40, %s41
      %p43 = scmp.eq.s32.totalorder %s42, 0
      %s45 = sadd.s32 %s44, 1
      %s46 = scalar_select %p43, %s44, %s45
      %p49 = pneg %p43
      %p50 = scmp.eq.s32.totalorder %s20, 1
      %p51 = por %p49, %p50
      %p52 = scmp.ne.s32.totalorder %s44, %s47
      %p53 = scmp.eq.s32.totalorder %s20, 0
      %p54 = por %p52, %p53
      %p55 = scmp.ne.s32.totalorder %s44, %s47
      %p56 = scmp.eq.s32.totalorder %s25, 1
      %p57 = por %p55, %p56
      %p58 = scmp.ne.s32.totalorder %s47, %s48
      %p59 = scmp.eq.s32.totalorder %s25, 0
      %p60 = por %p58, %p59
      %p61 = scmp.ne.s32.totalorder %s47, %s48
      %p62 = scmp.eq.s32.totalorder %s26, 1
      %p63 = por %p61, %p62
      %p65 = scmp.ne.s32.totalorder %s48, %s64
      %p66 = scmp.eq.s32.totalorder %s26, 0
      %p67 = por %p65, %p66
      %s68 = ssub.s32 %s27, %s39
      %p69 = scmp.eq.s32.totalorder %s68, 0
      %s71 = sadd.s32 %s70, 1
      %s72 = scalar_select %p69, %s70, %s71
      %p75 = pneg %p69
      %p76 = scmp.eq.s32.totalorder %s20, 1
      %p77 = por %p75, %p76
      %p78 = scmp.ne.s32.totalorder %s70, %s73
      %p79 = scmp.eq.s32.totalorder %s20, 0
      %p80 = por %p78, %p79
      %p81 = scmp.ne.s32.totalorder %s70, %s73
      %p82 = scmp.eq.s32.totalorder %s25, 1
      %p83 = por %p81, %p82
      %p84 = scmp.ne.s32.totalorder %s73, %s74
      %p85 = scmp.eq.s32.totalorder %s25, 0
      %p86 = por %p84, %p85
      %p87 = scmp.ne.s32.totalorder %s73, %s74
      %p88 = scmp.eq.s32.totalorder %s26, 1
      %p89 = por %p87, %p88
      %p91 = scmp.ne.s32.totalorder %s74, %s90
      %p92 = scmp.eq.s32.totalorder %s26, 0
      %p93 = por %p91, %p92
      %s94 = ssub.s32 %s28, %s35
      %p95 = scmp.eq.s32.totalorder %s94, 0
      %s97 = sadd.s32 %s96, 1
      %s98 = scalar_select %p95, %s96, %s97
      %p101 = pneg %p95
      %p102 = scmp.eq.s32.totalorder %s20, 1
      %p103 = por %p101, %p102
      %p104 = scmp.ne.s32.totalorder %s96, %s99
      %p105 = scmp.eq.s32.totalorder %s20, 0
      %p106 = por %p104, %p105
      %p107 = scmp.ne.s32.totalorder %s96, %s99
      %p108 = scmp.eq.s32.totalorder %s25, 1
      %p109 = por %p107, %p108
      %p110 = scmp.ne.s32.totalorder %s99, %s100
      %p111 = scmp.eq.s32.totalorder %s25, 0
      %p112 = por %p110, %p111
      %p113 = scmp.ne.s32.totalorder %s99, %s100
      %p114 = scmp.eq.s32.totalorder %s26, 1
      %p115 = por %p113, %p114
      %p117 = scmp.ne.s32.totalorder %s100, %s116
      %p118 = scmp.eq.s32.totalorder %s26, 0
      %p119 = por %p117, %p118
      %s120 = ssub.s32 %s27, %s39
      %p121 = scmp.eq.s32.totalorder %s120, 0
      %s123 = sadd.s32 %s122, 1
      %s124 = scalar_select %p121, %s122, %s123
      %p127 = pneg %p121
      %p128 = scmp.eq.s32.totalorder %s20, 1
      %p129 = por %p127, %p128
      %p130 = scmp.ne.s32.totalorder %s122, %s125
      %p131 = scmp.eq.s32.totalorder %s20, 0
      %p132 = por %p130, %p131
      %p133 = scmp.ne.s32.totalorder %s122, %s125
      %p134 = scmp.eq.s32.totalorder %s25, 1
      %p135 = por %p133, %p134
      %p136 = scmp.ne.s32.totalorder %s125, %s126
      %p137 = scmp.eq.s32.totalorder %s25, 0
      %p138 = por %p136, %p137
      %p139 = scmp.ne.s32.totalorder %s125, %s126
      %p140 = scmp.eq.s32.totalorder %s26, 1
      %p141 = por %p139, %p140
      %p143 = scmp.ne.s32.totalorder %s126, %s142
      %p144 = scmp.eq.s32.totalorder %s26, 0
      %p145 = por %p143, %p144
      %s147 = sadd.s32 %s146, 1
      %p150 = scmp.eq.s32.totalorder %s20, 1
      %p151 = scmp.ne.s32.totalorder %s146, %s148
      %p152 = scmp.eq.s32.totalorder %s20, 0
      %p153 = por %p151, %p152
      %p154 = scmp.ne.s32.totalorder %s146, %s148
      %p155 = scmp.eq.s32.totalorder %s25, 1
      %p156 = por %p154, %p155
      %p157 = scmp.ne.s32.totalorder %s148, %s149
      %p158 = scmp.eq.s32.totalorder %s25, 0
      %p159 = por %p157, %p158
      %p160 = scmp.ne.s32.totalorder %s148, %s149
      %p161 = scmp.eq.s32.totalorder %s26, 1
      %p162 = por %p160, %p161
      %p164 = scmp.ne.s32.totalorder %s149, %s163
      %p165 = scmp.eq.s32.totalorder %s26, 0
      %p166 = por %p164, %p165
      %s168 = sadd.s32 %s167, 1
      %p171 = scmp.eq.s32.totalorder %s20, 1
      %p172 = scmp.ne.s32.totalorder %s167, %s169
      %p173 = scmp.eq.s32.totalorder %s20, 0
      %p174 = por %p172, %p173
      %p175 = scmp.ne.s32.totalorder %s167, %s169
      %p176 = scmp.eq.s32.totalorder %s25, 1
      %p177 = por %p175, %p176
      %p178 = scmp.ne.s32.totalorder %s169, %s170
      %p179 = scmp.eq.s32.totalorder %s25, 0
      %p180 = por %p178, %p179
      %p181 = scmp.ne.s32.totalorder %s169, %s170
      %p182 = scmp.eq.s32.totalorder %s26, 1
      %p183 = por %p181, %p182
      %p185 = scmp.ne.s32.totalorder %s170, %s184
      %p186 = scmp.eq.s32.totalorder %s26, 0
      %p187 = por %p185, %p186
      %s189 = sadd.s32 %s188, 1
      %p192 = scmp.eq.s32.totalorder %s20, 1
      %p193 = scmp.ne.s32.totalorder %s188, %s190
      %p194 = scmp.eq.s32.totalorder %s20, 0
      %p195 = por %p193, %p194
      %p196 = scmp.ne.s32.totalorder %s188, %s190
      %p197 = scmp.eq.s32.totalorder %s25, 1
      %p198 = por %p196, %p197
      %p199 = scmp.ne.s32.totalorder %s190, %s191
      %p200 = scmp.eq.s32.totalorder %s25, 0
      %p201 = por %p199, %p200
      %p202 = scmp.ne.s32.totalorder %s190, %s191
      %p203 = scmp.eq.s32.totalorder %s26, 1
      %p204 = por %p202, %p203
      %p206 = scmp.ne.s32.totalorder %s191, %s205
      %p207 = scmp.eq.s32.totalorder %s26, 0
      %p208 = por %p206, %p207
      %s209 = ssub.s32 %s27, %s39
      %p210 = scmp.eq.s32.totalorder %s209, 0
      %s212 = sadd.s32 %s211, 1
      %s213 = scalar_select %p210, %s211, %s212
      %p216 = pneg %p210
      %p217 = scmp.eq.s32.totalorder %s20, 1
      %p218 = por %p216, %p217
      %p219 = scmp.ne.s32.totalorder %s211, %s214
      %p220 = scmp.eq.s32.totalorder %s20, 0
      %p221 = por %p219, %p220
      %p222 = scmp.ne.s32.totalorder %s211, %s214
      %p223 = scmp.eq.s32.totalorder %s25, 1
      %p224 = por %p222, %p223
      %p225 = scmp.ne.s32.totalorder %s214, %s215
      %p226 = scmp.eq.s32.totalorder %s25, 0
      %p227 = por %p225, %p226
      %p228 = scmp.ne.s32.totalorder %s214, %s215
      %p229 = scmp.eq.s32.totalorder %s26, 1
      %p230 = por %p228, %p229
      %p232 = scmp.ne.s32.totalorder %s215, %s231
      %p233 = scmp.eq.s32.totalorder %s26, 0
      %p234 = por %p232, %p233
      %p235 = scmp.le.s32.totalorder 1, %s20
      %p236 = scmp.lt.s32.totalorder %s20, 3
      %p237 = pnand %p235, %p236
      %p238 = pneg %p237
      // Predicated region
      $region9: #{tpu_custom_call.1} parent=5 // pred_check
        _
      $region10: #{tpu_custom_call.1} parent=5 // pred_check_branch
        %240 = sbr.rel (%p237) target = $region12
      $region11: #{tpu_custom_call.1} parent=5 // pred_region
        %s241 = ssub.s32 %s20, 1
        // Predicated region
        $region13: #{tpu_custom_call.1} parent=11 // pred_check
          %p242 = pneg %p112
        $region14: #{tpu_custom_call.1} parent=11 // pred_check_branch
          %244 = sbr.rel (%p242) target = $region16
        $region15: #{tpu_custom_call.1} parent=11 // pred_region
          %s245 = smul.u32 16, %s30
          %s247 = ssub.s32 1024, 1024
          %248 = vsyncadd [#allocation7], %s247
          %s249 = smul.addr %s245, 64
          %s250 = scalar_lea.hbm %s2, %s249
          %s251 = sshll.u32 [#allocation6], 4
          %s252 = int_to_ptr.vmem [resolvable:$true] %s251
          %257 = dma.hbm_to_vmem [thread:$0]  %s250, 1024, %s252, [#allocation7], 64, 64, 4
        $region16: #{tpu_custom_call.1} parent=11 // pred_fallthru
          _
        // Predicated region
        $region17: #{tpu_custom_call.1} parent=11 // pred_check
          %p258 = pneg %p159
        $region18: #{tpu_custom_call.1} parent=11 // pred_check_branch
          %260 = sbr.rel (%p258) target = $region20
        $region19: #{tpu_custom_call.1} parent=11 // pred_region
          _
        $region20: #{tpu_custom_call.1} parent=11 // pred_fallthru
          _
        // Predicated region
        $region21: #{tpu_custom_call.1} parent=11 // pred_check
          %p261 = pneg %p180
        $region22: #{tpu_custom_call.1} parent=11 // pred_check_branch
          %263 = sbr.rel (%p261) target = $region24
        $region23: #{tpu_custom_call.1} parent=11 // pred_region
          _
        $region24: #{tpu_custom_call.1} parent=11 // pred_fallthru
          _
        // Predicated region
        $region25: #{tpu_custom_call.1} parent=11 // pred_check
          %p264 = pneg %p201
        $region26: #{tpu_custom_call.1} parent=11 // pred_check_branch
          %266 = sbr.rel (%p264) target = $region28
        $region27: #{tpu_custom_call.1} parent=11 // pred_region
          %s268 = ssub.s32 2048, 2048
          %269 = vsyncadd [#allocation7], %s268
          %s270 = sshll.u32 [#allocation9], 4
          %s271 = int_to_ptr.vmem [resolvable:$true] %s270
          %276 = dma.hbm_to_vmem [thread:$0]  %s6, 2048, %s271, [#allocation7], 128, 128, 8
        $region28: #{tpu_custom_call.1} parent=11 // pred_fallthru
          _
      $region12: #{tpu_custom_call.1} parent=5 // pred_fallthru
        _
      %p277 = scmp.lt.s32.totalorder %s20, 2
      // Predicated region
      $region29: #{tpu_custom_call.1} parent=5 // pred_check
        %p278 = pneg %p277
      $region30: #{tpu_custom_call.1} parent=5 // pred_check_branch
        %280 = sbr.rel (%p278) target = $region32
      $region31: #{tpu_custom_call.1} parent=5 // pred_region
        // Predicated region
        $region33: #{tpu_custom_call.1} parent=31 // pred_check
          %p281 = pneg %p54
        $region34: #{tpu_custom_call.1} parent=31 // pred_check_branch
          %283 = sbr.rel (%p281) target = $region36
        $region35: #{tpu_custom_call.1} parent=31 // pred_region
          %s284 = sand.u32 %s20, 1
          %s285 = scalar_lea.sflag [#allocation4], %s284
          %s286 = sand.u32 %s44, 1
          %s287 = smul.addr %s286, 16
          %s288 = scalar_lea.vmem [#allocation3], %s287
          %s289 = smul.u32 2, %s27
          %s291 = ssub.s32 256, 256
          %292 = vsyncadd %s285, %s291
          %s293 = sadd.s32 %s28, %s289
          %s294 = smul.addr %s293, 128
          %s295 = scalar_lea.hbm %s0, %s294
          %s296 = sshll.u32 %s288, 4
          %s297 = int_to_ptr.vmem [resolvable:$true] %s296
          %302 = dma.hbm_to_vmem [thread:$0]  %s295, 256, %s297, %s285, 128, 128, 8
        $region36: #{tpu_custom_call.1} parent=31 // pred_fallthru
          _
        // Predicated region
        $region37: #{tpu_custom_call.1} parent=31 // pred_check
          %p303 = pneg %p80
        $region38: #{tpu_custom_call.1} parent=31 // pred_check_branch
          %305 = sbr.rel (%p303) target = $region40
        $region39: #{tpu_custom_call.1} parent=31 // pred_region
          %s306 = smul.u32 8, %s27
          %p307 = scmp.lt.s32.totalorder %s306, 15
          %s308 = scalar_select %p307, %s306, 15
          %s309 = smul.addr %s308, 8
          %s310 = scalar_lea.vmem %s1, %s309
          %s311 = smul.u32 8, %s27
        $region40: #{tpu_custom_call.1} parent=31 // pred_fallthru
          _
        // Predicated region
        $region41: #{tpu_custom_call.1} parent=31 // pred_check
          %p312 = pneg %p132
        $region42: #{tpu_custom_call.1} parent=31 // pred_check_branch
          %314 = sbr.rel (%p312) target = $region44
        $region43: #{tpu_custom_call.1} parent=31 // pred_region
          %s315 = sand.u32 %s20, 1
          %s316 = scalar_lea.sflag [#allocation4], %s315
          %s317 = sand.u32 %s122, 1
          %s318 = smul.addr %s317, 32
          %s319 = scalar_lea.vmem [#allocation8], %s318
          %s320 = smul.u32 8, %s27
          %s322 = ssub.s32 512, 512
          %323 = vsyncadd %s316, %s322
          %s324 = smul.addr %s320, 64
          %s325 = scalar_lea.hbm %s3, %s324
          %s326 = sshll.u32 %s319, 4
          %s327 = int_to_ptr.vmem [resolvable:$true] %s326
          %332 = dma.hbm_to_vmem [thread:$0]  %s325, 512, %s327, %s316, 64, 64, 4
        $region44: #{tpu_custom_call.1} parent=31 // pred_fallthru
          _
      $region32: #{tpu_custom_call.1} parent=5 // pred_fallthru
        _
      %p333 = scmp.le.s32.totalorder 1, %s20
      %p334 = scmp.lt.s32.totalorder %s20, 3
      %p335 = pnand %p333, %p334
      %p336 = pneg %p335
      // Predicated region
      $region45: #{tpu_custom_call.1} parent=5 // pred_check
        _
      $region46: #{tpu_custom_call.1} parent=5 // pred_check_branch
        %338 = sbr.rel (%p335) target = $region48
      $region47: #{tpu_custom_call.1} parent=5 // pred_region
        %s339 = ssub.s32 %s20, 1
        %s340 = sand.u32 %s25, 1
        %s341 = scalar_lea.sflag [#allocation4], %s340
        %s342 = sand.u32 %s47, 1
        %s343 = smul.addr %s342, 16
        %s344 = scalar_lea.vmem [#allocation3], %s343
        // Predicated region
        $region49: #{tpu_custom_call.1} parent=47 // pred_check
          %p345 = pneg %p60
        $region50: #{tpu_custom_call.1} parent=47 // pred_check_branch
          %347 = sbr.rel (%p345) target = $region52
        $region51: #{tpu_custom_call.1} parent=47 // pred_region
          %348 = dma.done %s341, 256
        $region52: #{tpu_custom_call.1} parent=47 // pred_fallthru
          _
        // Predicated region
        $region53: #{tpu_custom_call.1} parent=47 // pred_check
          %p349 = pneg %p112
        $region54: #{tpu_custom_call.1} parent=47 // pred_check_branch
          %351 = sbr.rel (%p349) target = $region56
        $region55: #{tpu_custom_call.1} parent=47 // pred_region
          %352 = dma.done [#allocation7], 1024
        $region56: #{tpu_custom_call.1} parent=47 // pred_fallthru
          _
        %s353 = sand.u32 %s25, 1
        %s354 = scalar_lea.sflag [#allocation4], %s353
        %s355 = sand.u32 %s125, 1
        %s356 = smul.addr %s355, 32
        %s357 = scalar_lea.vmem [#allocation8], %s356
        // Predicated region
        $region57: #{tpu_custom_call.1} parent=47 // pred_check
          %p358 = pneg %p138
        $region58: #{tpu_custom_call.1} parent=47 // pred_check_branch
          %360 = sbr.rel (%p358) target = $region60
        $region59: #{tpu_custom_call.1} parent=47 // pred_region
          %361 = dma.done %s354, 512
        $region60: #{tpu_custom_call.1} parent=47 // pred_fallthru
          _
        // Predicated region
        $region61: #{tpu_custom_call.1} parent=47 // pred_check
          %p362 = pneg %p201
        $region62: #{tpu_custom_call.1} parent=47 // pred_check_branch
          %364 = sbr.rel (%p362) target = $region64
        $region63: #{tpu_custom_call.1} parent=47 // pred_region
          %365 = dma.done [#allocation7], 2048
        $region64: #{tpu_custom_call.1} parent=47 // pred_fallthru
          _
        %s366 = sand.u32 %s25, 1
        %s367 = scalar_lea.sflag [#allocation4], %s366
        %s368 = sand.u32 %s47, 1
        %s369 = smul.addr %s368, 16
        %s370 = scalar_lea.vmem [#allocation3], %s369
        %p371 = pneg %p60
        %p372 = pneg %p57
        %s373 = smul.u32 8, %s29
        %p374 = scmp.lt.s32.totalorder %s373, 15
        %s375 = scalar_select %p374, %s373, 15
        %s376 = smul.addr %s375, 8
        %s377 = scalar_lea.vmem %s1, %s376
        %p378 = pneg %p86
        %p379 = pneg %p83
        %p380 = pneg %p112
        %p381 = pneg %p109
        %s382 = sand.u32 %s25, 1
        %s383 = scalar_lea.sflag [#allocation4], %s382
        %s384 = sand.u32 %s125, 1
        %s385 = smul.addr %s384, 32
        %s386 = scalar_lea.vmem [#allocation8], %s385
        %p387 = pneg %p138
        %p388 = pneg %p135
        %p389 = pneg %p159
        %p390 = pneg %p156
        %p391 = pneg %p180
        %p392 = pneg %p177
        %p393 = pneg %p201
        %p394 = pneg %p198
        %p395 = pneg %p227
        %p396 = pneg %p224
        %s397 = sand.u32 %s214, 1
        %s398 = scalar_lea.sflag [#allocation5], %s397
        %s399 = sand.u32 %s214, 1
        %s400 = smul.addr %s399, 32
        %s401 = scalar_lea.vmem [#allocation10], %s400
        %s402 = smul.u32 2, %s29
        %s403 = smul.u32 8, %s29
        %p404 = scmp.lt.s32.totalorder %s403, 15
        %s405 = scalar_select %p404, %s403, 15
        %s406 = smul.addr %s405, 8
        %s407 = scalar_lea.vmem %s1, %s406
        %s408 = smul.u32 8, %s29
        %s409 = smul.u32 16, %s30
        %s410 = smul.u32 8, %s29
        %s411 = smul.u32 8, %s29
        %p413 = scmp.eq.s32.totalorder %s30, 0
        // Predicated region
        $region65: #{tpu_custom_call.1} parent=47 // pred_check
          %p414 = pneg %p413
        $region66: #{tpu_custom_call.1} parent=47 // pred_check_branch
          %416 = sbr.rel (%p414) target = $region68
        $region67: #{tpu_custom_call.1} parent=47 // pred_region
          %417 = vst [vmem:[#allocation2] sm:$0xff] 0.0
          %418 = vst [vmem:[#allocation2 + $0x8] sm:$0xff] 0.0
          %419 = vst [vmem:[#allocation2 + $0x10] sm:$0xff] 0.0
          %420 = vst [vmem:[#allocation2 + $0x18] sm:$0xff] 0.0
          %421 = vst [vmem:[#allocation2 + $0x20] sm:$0xff] 0.0
          %422 = vst [vmem:[#allocation2 + $0x28] sm:$0xff] 0.0
          %423 = vst [vmem:[#allocation2 + $0x30] sm:$0xff] 0.0
          %424 = vst [vmem:[#allocation2 + $0x38] sm:$0xff] 0.0
        $region68: #{tpu_custom_call.1} parent=47 // pred_fallthru
          _
        %v425 = vld [vmem:[%s344] sm:$0xff]
        %v426 = vld [vmem:[%s344 + $0x8] sm:$0xff]
        %v427 = vunpack.c.l.s8.bf16 %v425
        %v428 = vunpack.c.h.s8.bf16 %v425
        %v429 = vunpack.c.l.s8.bf16 %v426
        %v430 = vunpack.c.h.s8.bf16 %v426
        %v431 = vld [vmem:[#allocation2] sm:$0xff]
        %v432 = vld [vmem:[#allocation2 + $0x8] sm:$0xff]
        %v433 = vld [vmem:[#allocation2 + $0x10] sm:$0xff]
        %v434 = vld [vmem:[#allocation2 + $0x18] sm:$0xff]
        %v435 = vld [vmem:[#allocation2 + $0x20] sm:$0xff]
        %v436 = vld [vmem:[#allocation2 + $0x28] sm:$0xff]
        %v437 = vld [vmem:[#allocation2 + $0x30] sm:$0xff]
        %v438 = vld [vmem:[#allocation2 + $0x38] sm:$0xff]
        %v439 = vld [vmem:[#allocation6] sm:$0xf]
        %v440 = vld [vmem:[#allocation6 + $0x4] sm:$0xf]
        %v441 = vld [vmem:[#allocation6 + $0x8] sm:$0xf]
        %v442 = vld [vmem:[#allocation6 + $0xc] sm:$0xf]
        %v443 = vld [vmem:[#allocation6 + $0x10] sm:$0xf]
        %v444 = vld [vmem:[#allocation6 + $0x14] sm:$0xf]
        %v445 = vld [vmem:[#allocation6 + $0x18] sm:$0xf]
        %v446 = vld [vmem:[#allocation6 + $0x1c] sm:$0xf]
        %v447 = vld [vmem:[#allocation6 + $0x20] sm:$0xf]
        %v448 = vld [vmem:[#allocation6 + $0x24] sm:$0xf]
        %v449 = vld [vmem:[#allocation6 + $0x28] sm:$0xf]
        %v450 = vld [vmem:[#allocation6 + $0x2c] sm:$0xf]
        %v451 = vld [vmem:[#allocation6 + $0x30] sm:$0xf]
        %v452 = vld [vmem:[#allocation6 + $0x34] sm:$0xf]
        %v453 = vld [vmem:[#allocation6 + $0x38] sm:$0xf]
        %v454 = vld [vmem:[#allocation6 + $0x3c] sm:$0xf]
        %v471 = vunpack.c.l.b16 %v439
        %v472 = vunpack.c.l.b16 %v440
        %v473 = vunpack.c.l.b16 %v441
        %v474 = vunpack.c.l.b16 %v442
        %v475 = vunpack.c.l.b16 %v443
        %v476 = vunpack.c.l.b16 %v444
        %v477 = vunpack.c.l.b16 %v445
        %v478 = vunpack.c.l.b16 %v446
        %v479 = vunpack.c.l.b16 %v447
        %v480 = vunpack.c.l.b16 %v448
        %v481 = vunpack.c.l.b16 %v449
        %v482 = vunpack.c.l.b16 %v450
        %v483 = vunpack.c.l.b16 %v451
        %v484 = vunpack.c.l.b16 %v452
        %v485 = vunpack.c.l.b16 %v453
        %v486 = vunpack.c.l.b16 %v454
        %v487 = vpack.c.b16 %v472, %v471
        %v488 = vpack.c.b16 %v474, %v473
        %v489 = vpack.c.b16 %v476, %v475
        %v490 = vpack.c.b16 %v478, %v477
        %v491 = vpack.c.b16 %v480, %v479
        %v492 = vpack.c.b16 %v482, %v481
        %v493 = vpack.c.b16 %v484, %v483
        %v494 = vpack.c.b16 %v486, %v485
        %503 = vmatprep.subr.bf16.mxu0 0
        %504 = vmatpush1.bf16.msra.mxu0 %v494
        %505 = vmatprep.subr.bf16.mxu0 0
        %506 = vmatpush1.bf16.msra.mxu0 %v493
        %507 = vmatprep.subr.bf16.mxu0 0
        %508 = vmatpush1.bf16.msra.mxu0 %v492
        %509 = vmatprep.subr.bf16.mxu0 0
        %510 = vmatpush1.bf16.msra.mxu0 %v491
        %511 = vmatprep.subr.bf16.mxu0 0
        %512 = vmatpush1.bf16.msra.mxu0 %v490
        %513 = vmatprep.subr.bf16.mxu0 0
        %514 = vmatpush1.bf16.msra.mxu0 %v489
        %515 = vmatprep.subr.bf16.mxu0 0
        %516 = vmatpush1.bf16.msra.mxu0 %v488
        %517 = vmatprep.subr.bf16.mxu0 0
        %518 = vmatpush1.bf16.msra.mxu0 %v487
        %519 = vmatprep.subr.bf16.mxu0 0
        %520 = vmatpush2.bf16.msra.mxu0 0
        %521 = vmatprep.subr.bf16.mxu0 0
        %522 = vmatpush2.bf16.msra.mxu0 0
        %523 = vmatprep.subr.bf16.mxu0 0
        %524 = vmatpush2.bf16.msra.mxu0 0
        %525 = vmatprep.subr.bf16.mxu0 0
        %526 = vmatpush2.bf16.msra.mxu0 0
        %527 = vmatprep.subr.bf16.mxu0 0
        %528 = vmatpush2.bf16.msra.mxu0 0
        %529 = vmatprep.subr.bf16.mxu0 0
        %530 = vmatpush2.bf16.msra.mxu0 0
        %531 = vmatprep.subr.bf16.mxu0 0
        %532 = vmatpush2.bf16.msra.mxu0 0
        %533 = vmatprep.subr.bf16.mxu0 0
        %534 = vmatpush2.bf16.msra.mxu0 0
        %535 = vmatprep.mubr.bf16.mxu0 0
        %536 = vmatmul.mubr.bf16.gmra.mxu0 %v427
        %v537 = vpop.f32.mrf.mxu0
        %v538 = vadd.f32 0.0, %v537
        %v539 = vpop.f32.mrf.mxu0
        %v540 = vpop.f32.mrf.mxu0
        %v541 = vadd.f32 0.0, %v540
        %v542 = vpop.f32.mrf.mxu0
        %543 = vmatprep.mubr.bf16.mxu0 0
        %544 = vmatmul.mubr.bf16.gmra.mxu0 %v428
        %v545 = vpop.f32.mrf.mxu0
        %v546 = vadd.f32 0.0, %v545
        %v547 = vpop.f32.mrf.mxu0
        %v548 = vpop.f32.mrf.mxu0
        %v549 = vadd.f32 0.0, %v548
        %v550 = vpop.f32.mrf.mxu0
        %551 = vmatprep.mubr.bf16.mxu0 0
        %552 = vmatmul.mubr.bf16.gmra.mxu0 %v429
        %v553 = vpop.f32.mrf.mxu0
        %v554 = vadd.f32 0.0, %v553
        %v555 = vpop.f32.mrf.mxu0
        %v556 = vpop.f32.mrf.mxu0
        %v557 = vadd.f32 0.0, %v556
        %v558 = vpop.f32.mrf.mxu0
        %559 = vmatprep.mubr.bf16.mxu0 0
        %560 = vmatmul.mubr.bf16.gmra.mxu0 %v430
        %v561 = vpop.f32.mrf.mxu0
        %v562 = vadd.f32 0.0, %v561
        %v563 = vpop.f32.mrf.mxu0
        %v564 = vpop.f32.mrf.mxu0
        %v565 = vadd.f32 0.0, %v564
        %v566 = vpop.f32.mrf.mxu0
        %567 = vdwg.mxu0
        %v568 = vadd.f32 %v431, %v538
        %v569 = vadd.f32 %v432, %v541
        %v570 = vadd.f32 %v433, %v546
        %v571 = vadd.f32 %v434, %v549
        %v572 = vadd.f32 %v435, %v554
        %v573 = vadd.f32 %v436, %v557
        %v574 = vadd.f32 %v437, %v562
        %v575 = vadd.f32 %v438, %v565
        %576 = vst [vmem:[#allocation2] sm:$0xff] %v568
        %577 = vst [vmem:[#allocation2 + $0x8] sm:$0xff] %v569
        %578 = vst [vmem:[#allocation2 + $0x10] sm:$0xff] %v570
        %579 = vst [vmem:[#allocation2 + $0x18] sm:$0xff] %v571
        %580 = vst [vmem:[#allocation2 + $0x20] sm:$0xff] %v572
        %581 = vst [vmem:[#allocation2 + $0x28] sm:$0xff] %v573
        %582 = vst [vmem:[#allocation2 + $0x30] sm:$0xff] %v574
        %583 = vst [vmem:[#allocation2 + $0x38] sm:$0xff] %v575
        // Predicated region
        $region69: #{tpu_custom_call.1} parent=47 // pred_check
          %p584 = pneg %p413
        $region70: #{tpu_custom_call.1} parent=47 // pred_check_branch
          %586 = sbr.rel (%p584) target = $region72
        $region71: #{tpu_custom_call.1} parent=47 // pred_region
          %v587 = vld [vmem:[#allocation2] sm:$0xff]
          %v588 = vld [vmem:[#allocation2 + $0x8] sm:$0xff]
          %v589 = vld [vmem:[#allocation2 + $0x10] sm:$0xff]
          %v590 = vld [vmem:[#allocation2 + $0x18] sm:$0xff]
          %v591 = vld [vmem:[#allocation2 + $0x20] sm:$0xff]
          %v592 = vld [vmem:[#allocation2 + $0x28] sm:$0xff]
          %v593 = vld [vmem:[#allocation2 + $0x30] sm:$0xff]
          %v594 = vld [vmem:[#allocation2 + $0x38] sm:$0xff]
          %v595 = vld [vmem:[%s407] sm:$0xff]
          %v596 = vld [vmem:[%s407 + $0x8] sm:$0xff]
          %v597 = vld [vmem:[%s407 + $0x10] sm:$0xff]
          %v598 = vld [vmem:[%s407 + $0x18] sm:$0xff]
          %v599 = vld [vmem:[%s407 + $0x20] sm:$0xff]
          %v600 = vld [vmem:[%s407 + $0x28] sm:$0xff]
          %v601 = vld [vmem:[%s407 + $0x30] sm:$0xff]
          %v602 = vld [vmem:[%s407 + $0x38] sm:$0xff]
          %604 = vset.pattern.permute.xlu0 0
          %605 = vperm.xlu0 %604, %v595
          %v606 = vpop.permute.xlu0 %605
          %609 = vset.pattern.permute.xlu0 0
          %610 = vperm.xlu0 %609, %v596
          %v611 = vpop.permute.xlu0 %610
          %614 = vset.pattern.permute.xlu0 0
          %615 = vperm.xlu0 %614, %v597
          %v616 = vpop.permute.xlu0 %615
          %619 = vset.pattern.permute.xlu0 0
          %620 = vperm.xlu0 %619, %v598
          %v621 = vpop.permute.xlu0 %620
          %624 = vset.pattern.permute.xlu0 0
          %625 = vperm.xlu0 %624, %v599
          %v626 = vpop.permute.xlu0 %625
          %629 = vset.pattern.permute.xlu0 0
          %630 = vperm.xlu0 %629, %v600
          %v631 = vpop.permute.xlu0 %630
          %634 = vset.pattern.permute.xlu0 0
          %635 = vperm.xlu0 %634, %v601
          %v636 = vpop.permute.xlu0 %635
          %639 = vset.pattern.permute.xlu0 0
          %640 = vperm.xlu0 %639, %v602
          %v641 = vpop.permute.xlu0 %640
          %v643 = vmul.f32 %v587, %v606
          %v644 = vmul.f32 %v588, %v611
          %v645 = vmul.f32 %v589, %v616
          %v646 = vmul.f32 %v590, %v621
          %v647 = vmul.f32 %v591, %v626
          %v648 = vmul.f32 %v592, %v631
          %v649 = vmul.f32 %v593, %v636
          %v650 = vmul.f32 %v594, %v641
          %v651 = vld [vmem:[%s4] sm:$0xff]
          %v652 = vld [vmem:[%s4 + $0x8] sm:$0xff]
          %v653 = vld [vmem:[%s4 + $0x10] sm:$0xff]
          %v654 = vld [vmem:[%s4 + $0x18] sm:$0xff]
          %v655 = vld [vmem:[%s4 + $0x20] sm:$0xff]
          %v656 = vld [vmem:[%s4 + $0x28] sm:$0xff]
          %v657 = vld [vmem:[%s4 + $0x30] sm:$0xff]
          %v658 = vld [vmem:[%s4 + $0x38] sm:$0xff]
          %v659 = vld [vmem:[%s4 + $0x40] sm:$0xff]
          %v660 = vld [vmem:[%s4 + $0x48] sm:$0xff]
          %v661 = vld [vmem:[%s4 + $0x50] sm:$0xff]
          %v662 = vld [vmem:[%s4 + $0x58] sm:$0xff]
          %v663 = vld [vmem:[%s4 + $0x60] sm:$0xff]
          %v664 = vld [vmem:[%s4 + $0x68] sm:$0xff]
          %v665 = vld [vmem:[%s4 + $0x70] sm:$0xff]
          %v666 = vld [vmem:[%s4 + $0x78] sm:$0xff]
          %v667 = vld [vmem:[%s357] sm:$0xf]
          %v668 = vld [vmem:[%s357 + $0x4] sm:$0xf]
          %v669 = vld [vmem:[%s357 + $0x8] sm:$0xf]
          %v670 = vld [vmem:[%s357 + $0xc] sm:$0xf]
          %v671 = vld [vmem:[%s357 + $0x10] sm:$0xf]
          %v672 = vld [vmem:[%s357 + $0x14] sm:$0xf]
          %v673 = vld [vmem:[%s357 + $0x18] sm:$0xf]
          %v674 = vld [vmem:[%s357 + $0x1c] sm:$0xf]
          %v675 = vunpack.c.l.bf16 %v667
          %v676 = vunpack.c.l.bf16 %v668
          %v677 = vunpack.c.l.bf16 %v669
          %v678 = vunpack.c.l.bf16 %v670
          %v679 = vunpack.c.l.bf16 %v671
          %v680 = vunpack.c.l.bf16 %v672
          %v681 = vunpack.c.l.bf16 %v673
          %v682 = vunpack.c.l.bf16 %v674
          %v683 = vld [vmem:[#allocation9] sm:$0xff]
          %v684 = vld [vmem:[#allocation9 + $0x8] sm:$0xff]
          %v685 = vld [vmem:[#allocation9 + $0x10] sm:$0xff]
          %v686 = vld [vmem:[#allocation9 + $0x18] sm:$0xff]
          %v687 = vld [vmem:[#allocation9 + $0x20] sm:$0xff]
          %v688 = vld [vmem:[#allocation9 + $0x28] sm:$0xff]
          %v689 = vld [vmem:[#allocation9 + $0x30] sm:$0xff]
          %v690 = vld [vmem:[#allocation9 + $0x38] sm:$0xff]
          %v691 = vld [vmem:[#allocation9 + $0x40] sm:$0xff]
          %v692 = vld [vmem:[#allocation9 + $0x48] sm:$0xff]
          %v693 = vld [vmem:[#allocation9 + $0x50] sm:$0xff]
          %v694 = vld [vmem:[#allocation9 + $0x58] sm:$0xff]
          %v695 = vld [vmem:[#allocation9 + $0x60] sm:$0xff]
          %v696 = vld [vmem:[#allocation9 + $0x68] sm:$0xff]
          %v697 = vld [vmem:[#allocation9 + $0x70] sm:$0xff]
          %v698 = vld [vmem:[#allocation9 + $0x78] sm:$0xff]
          %699 = vmatprep.subr.mxu0 0.0
          %700 = vmatpush1.msra.mxu0 %v698
          %701 = vmatprep.subr.mxu0 0.0
          %702 = vmatpush1.msra.mxu0 %v697
          %703 = vmatprep.subr.mxu0 0.0
          %704 = vmatpush1.msra.mxu0 %v696
          %705 = vmatprep.subr.mxu0 0.0
          %706 = vmatpush1.msra.mxu0 %v695
          %707 = vmatprep.subr.mxu0 0.0
          %708 = vmatpush1.msra.mxu0 %v694
          %709 = vmatprep.subr.mxu0 0.0
          %710 = vmatpush1.msra.mxu0 %v693
          %711 = vmatprep.subr.mxu0 0.0
          %712 = vmatpush1.msra.mxu0 %v692
          %713 = vmatprep.subr.mxu0 0.0
          %714 = vmatpush1.msra.mxu0 %v691
          %715 = vmatprep.subr.mxu0 0.0
          %716 = vmatpush1.msra.mxu0 %v690
          %717 = vmatprep.subr.mxu0 0.0
          %718 = vmatpush1.msra.mxu0 %v689
          %719 = vmatprep.subr.mxu0 0.0
          %720 = vmatpush1.msra.mxu0 %v688
          %721 = vmatprep.subr.mxu0 0.0
          %722 = vmatpush1.msra.mxu0 %v687
          %723 = vmatprep.subr.mxu0 0.0
          %724 = vmatpush1.msra.mxu0 %v686
          %725 = vmatprep.subr.mxu0 0.0
          %726 = vmatpush1.msra.mxu0 %v685
          %727 = vmatprep.subr.mxu0 0.0
          %728 = vmatpush1.msra.mxu0 %v684
          %729 = vmatprep.subr.mxu0 0.0
          %730 = vmatpush1.msra.mxu0 %v683
          %731 = vmatprep.subr.mxu0 0.0
          %732 = vmatpush2.msra.mxu0 0.0
          %733 = vmatprep.subr.mxu0 0.0
          %734 = vmatpush2.msra.mxu0 0.0
          %735 = vmatprep.subr.mxu0 0.0
          %736 = vmatpush2.msra.mxu0 0.0
          %737 = vmatprep.subr.mxu0 0.0
          %738 = vmatpush2.msra.mxu0 0.0
          %739 = vmatprep.subr.mxu0 0.0
          %740 = vmatpush2.msra.mxu0 0.0
          %741 = vmatprep.subr.mxu0 0.0
          %742 = vmatpush2.msra.mxu0 0.0
          %743 = vmatprep.subr.mxu0 0.0
          %744 = vmatpush2.msra.mxu0 0.0
          %745 = vmatprep.subr.mxu0 0.0
          %746 = vmatpush2.msra.mxu0 0.0
          %747 = vmatprep.subr.mxu0 0.0
          %748 = vmatpush2.msra.mxu0 0.0
          %749 = vmatprep.subr.mxu0 0.0
          %750 = vmatpush2.msra.mxu0 0.0
          %751 = vmatprep.subr.mxu0 0.0
          %752 = vmatpush2.msra.mxu0 0.0
          %753 = vmatprep.subr.mxu0 0.0
          %754 = vmatpush2.msra.mxu0 0.0
          %755 = vmatprep.subr.mxu0 0.0
          %756 = vmatpush2.msra.mxu0 0.0
          %757 = vmatprep.subr.mxu0 0.0
          %758 = vmatpush2.msra.mxu0 0.0
          %759 = vmatprep.subr.mxu0 0.0
          %760 = vmatpush2.msra.mxu0 0.0
          %761 = vmatprep.subr.mxu0 0.0
          %762 = vmatpush2.msra.mxu0 0.0
          %763 = vmatprep.mubr.f32.mxu0 0.0
          %764 = vmatmul.mubr.f32.gmra.mxu0 %v675
          %v765 = vpop.f32.mrf.mxu0
          %v766 = vadd.f32 0.0, %v765
          %v767 = vpop.f32.mrf.mxu0
          %768 = vmatprep.mubr.f32.mxu0 0.0
          %769 = vmatmul.mubr.f32.gmra.mxu0 %v676
          %v770 = vpop.f32.mrf.mxu0
          %v771 = vadd.f32 0.0, %v770
          %v772 = vpop.f32.mrf.mxu0
          %773 = vmatprep.mubr.f32.mxu0 0.0
          %774 = vmatmul.mubr.f32.gmra.mxu0 %v677
          %v775 = vpop.f32.mrf.mxu0
          %v776 = vadd.f32 0.0, %v775
          %v777 = vpop.f32.mrf.mxu0
          %778 = vmatprep.mubr.f32.mxu0 0.0
          %779 = vmatmul.mubr.f32.gmra.mxu0 %v678
          %v780 = vpop.f32.mrf.mxu0
          %v781 = vadd.f32 0.0, %v780
          %v782 = vpop.f32.mrf.mxu0
          %783 = vmatprep.mubr.f32.mxu0 0.0
          %784 = vmatmul.mubr.f32.gmra.mxu0 %v679
          %v785 = vpop.f32.mrf.mxu0
          %v786 = vadd.f32 0.0, %v785
          %v787 = vpop.f32.mrf.mxu0
          %788 = vmatprep.mubr.f32.mxu0 0.0
          %789 = vmatmul.mubr.f32.gmra.mxu0 %v680
          %v790 = vpop.f32.mrf.mxu0
          %v791 = vadd.f32 0.0, %v790
          %v792 = vpop.f32.mrf.mxu0
          %793 = vmatprep.mubr.f32.mxu0 0.0
          %794 = vmatmul.mubr.f32.gmra.mxu0 %v681
          %v795 = vpop.f32.mrf.mxu0
          %v796 = vadd.f32 0.0, %v795
          %v797 = vpop.f32.mrf.mxu0
          %798 = vmatprep.mubr.f32.mxu0 0.0
          %799 = vmatmul.mubr.f32.gmra.mxu0 %v682
          %v800 = vpop.f32.mrf.mxu0
          %v801 = vadd.f32 0.0, %v800
          %v802 = vpop.f32.mrf.mxu0
          %803 = vdwg.mxu0
          %804 = vmatprep.subr.mxu0 0.0
          %805 = vmatpush1.msra.mxu0 %v666
          %806 = vmatprep.subr.mxu0 0.0
          %807 = vmatpush1.msra.mxu0 %v665
          %808 = vmatprep.subr.mxu0 0.0
          %809 = vmatpush1.msra.mxu0 %v664
          %810 = vmatprep.subr.mxu0 0.0
          %811 = vmatpush1.msra.mxu0 %v663
          %812 = vmatprep.subr.mxu0 0.0
          %813 = vmatpush1.msra.mxu0 %v662
          %814 = vmatprep.subr.mxu0 0.0
          %815 = vmatpush1.msra.mxu0 %v661
          %816 = vmatprep.subr.mxu0 0.0
          %817 = vmatpush1.msra.mxu0 %v660
          %818 = vmatprep.subr.mxu0 0.0
          %819 = vmatpush1.msra.mxu0 %v659
          %820 = vmatprep.subr.mxu0 0.0
          %821 = vmatpush1.msra.mxu0 %v658
          %822 = vmatprep.subr.mxu0 0.0
          %823 = vmatpush1.msra.mxu0 %v657
          %824 = vmatprep.subr.mxu0 0.0
          %825 = vmatpush1.msra.mxu0 %v656
          %826 = vmatprep.subr.mxu0 0.0
          %827 = vmatpush1.msra.mxu0 %v655
          %828 = vmatprep.subr.mxu0 0.0
          %829 = vmatpush1.msra.mxu0 %v654
          %830 = vmatprep.subr.mxu0 0.0
          %831 = vmatpush1.msra.mxu0 %v653
          %832 = vmatprep.subr.mxu0 0.0
          %833 = vmatpush1.msra.mxu0 %v652
          %834 = vmatprep.subr.mxu0 0.0
          %835 = vmatpush1.msra.mxu0 %v651
          %836 = vmatprep.subr.mxu0 0.0
          %837 = vmatpush2.msra.mxu0 0.0
          %838 = vmatprep.subr.mxu0 0.0
          %839 = vmatpush2.msra.mxu0 0.0
          %840 = vmatprep.subr.mxu0 0.0
          %841 = vmatpush2.msra.mxu0 0.0
          %842 = vmatprep.subr.mxu0 0.0
          %843 = vmatpush2.msra.mxu0 0.0
          %844 = vmatprep.subr.mxu0 0.0
          %845 = vmatpush2.msra.mxu0 0.0
          %846 = vmatprep.subr.mxu0 0.0
          %847 = vmatpush2.msra.mxu0 0.0
          %848 = vmatprep.subr.mxu0 0.0
          %849 = vmatpush2.msra.mxu0 0.0
          %850 = vmatprep.subr.mxu0 0.0
          %851 = vmatpush2.msra.mxu0 0.0
          %852 = vmatprep.subr.mxu0 0.0
          %853 = vmatpush2.msra.mxu0 0.0
          %854 = vmatprep.subr.mxu0 0.0
          %855 = vmatpush2.msra.mxu0 0.0
          %856 = vmatprep.subr.mxu0 0.0
          %857 = vmatpush2.msra.mxu0 0.0
          %858 = vmatprep.subr.mxu0 0.0
          %859 = vmatpush2.msra.mxu0 0.0
          %860 = vmatprep.subr.mxu0 0.0
          %861 = vmatpush2.msra.mxu0 0.0
          %862 = vmatprep.subr.mxu0 0.0
          %863 = vmatpush2.msra.mxu0 0.0
          %864 = vmatprep.subr.mxu0 0.0
          %865 = vmatpush2.msra.mxu0 0.0
          %866 = vmatprep.subr.mxu0 0.0
          %867 = vmatpush2.msra.mxu0 0.0
          %868 = vmatprep.mubr.f32.mxu0 0.0
          %869 = vmatmul.mubr.f32.gmra.mxu0 %v643
          %v870 = vpop.f32.mrf.mxu0
          %v871 = vadd.f32 %v766, %v870
          %v872 = vpop.f32.mrf.mxu0
          %873 = vmatprep.mubr.f32.mxu0 0.0
          %874 = vmatmul.mubr.f32.gmra.mxu0 %v644
          %v875 = vpop.f32.mrf.mxu0
          %v876 = vadd.f32 %v771, %v875
          %v877 = vpop.f32.mrf.mxu0
          %878 = vmatprep.mubr.f32.mxu0 0.0
          %879 = vmatmul.mubr.f32.gmra.mxu0 %v645
          %v880 = vpop.f32.mrf.mxu0
          %v881 = vadd.f32 %v776, %v880
          %v882 = vpop.f32.mrf.mxu0
          %883 = vmatprep.mubr.f32.mxu0 0.0
          %884 = vmatmul.mubr.f32.gmra.mxu0 %v646
          %v885 = vpop.f32.mrf.mxu0
          %v886 = vadd.f32 %v781, %v885
          %v887 = vpop.f32.mrf.mxu0
          %888 = vmatprep.mubr.f32.mxu0 0.0
          %889 = vmatmul.mubr.f32.gmra.mxu0 %v647
          %v890 = vpop.f32.mrf.mxu0
          %v891 = vadd.f32 %v786, %v890
          %v892 = vpop.f32.mrf.mxu0
          %893 = vmatprep.mubr.f32.mxu0 0.0
          %894 = vmatmul.mubr.f32.gmra.mxu0 %v648
          %v895 = vpop.f32.mrf.mxu0
          %v896 = vadd.f32 %v791, %v895
          %v897 = vpop.f32.mrf.mxu0
          %898 = vmatprep.mubr.f32.mxu0 0.0
          %899 = vmatmul.mubr.f32.gmra.mxu0 %v649
          %v900 = vpop.f32.mrf.mxu0
          %v901 = vadd.f32 %v796, %v900
          %v902 = vpop.f32.mrf.mxu0
          %903 = vmatprep.mubr.f32.mxu0 0.0
          %904 = vmatmul.mubr.f32.gmra.mxu0 %v650
          %v905 = vpop.f32.mrf.mxu0
          %v906 = vadd.f32 %v801, %v905
          %v907 = vpop.f32.mrf.mxu0
          %908 = vdwg.mxu0
          %v909 = vld [vmem:[%s5] sm:$0x1]
          %v911 = vlaneseq
          %v912 = vshrl.u32 %v911, 7
          %v913 = vsub.s32 0, %v912
          %v914 = vrot.slane %v909, %v913
          %v916 = vadd.f32 %v871, %v914
          %v917 = vadd.f32 %v876, %v914
          %v918 = vadd.f32 %v881, %v914
          %v919 = vadd.f32 %v886, %v914
          %v920 = vadd.f32 %v891, %v914
          %v921 = vadd.f32 %v896, %v914
          %v922 = vadd.f32 %v901, %v914
          %v923 = vadd.f32 %v906, %v914
          %v924 = vmul.f32 %v916, %v916
          %v925 = vmul.f32 %v917, %v917
          %v926 = vmul.f32 %v918, %v918
          %v927 = vmul.f32 %v919, %v919
          %v928 = vmul.f32 %v920, %v920
          %v929 = vmul.f32 %v921, %v921
          %v930 = vmul.f32 %v922, %v922
          %v931 = vmul.f32 %v923, %v923
          %932 = vadd.xlane.f32.xlu0 %v924
          %v933 = vpop.xlane.xlu0 %932
          %934 = vadd.xlane.f32.xlu0 %v925
          %v935 = vpop.xlane.xlu0 %934
          %936 = vadd.xlane.f32.xlu0 %v926
          %v937 = vpop.xlane.xlu0 %936
          %938 = vadd.xlane.f32.xlu0 %v927
          %v939 = vpop.xlane.xlu0 %938
          %940 = vadd.xlane.f32.xlu0 %v928
          %v941 = vpop.xlane.xlu0 %940
          %942 = vadd.xlane.f32.xlu0 %v929
          %v943 = vpop.xlane.xlu0 %942
          %944 = vadd.xlane.f32.xlu0 %v930
          %v945 = vpop.xlane.xlu0 %944
          %946 = vadd.xlane.f32.xlu0 %v931
          %v947 = vpop.xlane.xlu0 %946
          %v948 = vmax.f32 %v933, 1e-24
          %v949 = vmax.f32 %v935, 1e-24
          %v950 = vmax.f32 %v937, 1e-24
          %v951 = vmax.f32 %v939, 1e-24
          %v952 = vmax.f32 %v941, 1e-24
          %v953 = vmax.f32 %v943, 1e-24
          %v954 = vmax.f32 %v945, 1e-24
          %v955 = vmax.f32 %v947, 1e-24
          %v956 = vrsqrt.pop %v948
          %v957 = vrsqrt.pop %v949
          %v958 = vrsqrt.pop %v950
          %v959 = vrsqrt.pop %v951
          %v960 = vrsqrt.pop %v952
          %v961 = vrsqrt.pop %v953
          %v962 = vrsqrt.pop %v954
          %v963 = vrsqrt.pop %v955
          %v964 = vmul.f32 %v916, %v956
          %v965 = vmul.f32 %v917, %v957
          %v966 = vmul.f32 %v918, %v958
          %v967 = vmul.f32 %v919, %v959
          %v968 = vmul.f32 %v920, %v960
          %v969 = vmul.f32 %v921, %v961
          %v970 = vmul.f32 %v922, %v962
          %v971 = vmul.f32 %v923, %v963
          %v972 = vmax.f32 %v964, 0.0
          %v973 = vmax.f32 %v965, 0.0
          %v974 = vmax.f32 %v966, 0.0
          %v975 = vmax.f32 %v967, 0.0
          %v976 = vmax.f32 %v968, 0.0
          %v977 = vmax.f32 %v969, 0.0
          %v978 = vmax.f32 %v970, 0.0
          %v979 = vmax.f32 %v971, 0.0
          %v980 = vpack.c.bf16 %v973, %v972
          %v981 = vpack.c.bf16 %v975, %v974
          %v982 = vpack.c.bf16 %v977, %v976
          %v983 = vpack.c.bf16 %v979, %v978
          %v988 = vunpack.c.l.b16 %v980
          %v989 = vunpack.c.h.b16 %v980
          %v990 = vunpack.c.l.b16 %v981
          %v991 = vunpack.c.h.b16 %v981
          %v992 = vunpack.c.l.b16 %v982
          %v993 = vunpack.c.h.b16 %v982
          %v994 = vunpack.c.l.b16 %v983
          %v995 = vunpack.c.h.b16 %v983
          %v996 = vpack.c.b16 %v988, %v988
          %v997 = vpack.c.b16 %v989, %v989
          %v998 = vpack.c.b16 %v990, %v990
          %v999 = vpack.c.b16 %v991, %v991
          %v1000 = vpack.c.b16 %v992, %v992
          %v1001 = vpack.c.b16 %v993, %v993
          %v1002 = vpack.c.b16 %v994, %v994
          %v1003 = vpack.c.b16 %v995, %v995
          %1012 = vst [vmem:[%s401] sm:$0xf] %v996
          %1013 = vst [vmem:[%s401 + $0x4] sm:$0xf] %v997
          %1014 = vst [vmem:[%s401 + $0x8] sm:$0xf] %v998
          %1015 = vst [vmem:[%s401 + $0xc] sm:$0xf] %v999
          %1016 = vst [vmem:[%s401 + $0x10] sm:$0xf] %v1000
          %1017 = vst [vmem:[%s401 + $0x14] sm:$0xf] %v1001
          %1018 = vst [vmem:[%s401 + $0x18] sm:$0xf] %v1002
          %1019 = vst [vmem:[%s401 + $0x1c] sm:$0xf] %v1003
        $region72: #{tpu_custom_call.1} parent=47 // pred_fallthru
          _
        %s1020 = sand.u32 %s214, 1
        %s1021 = scalar_lea.sflag [#allocation5], %s1020
        %s1022 = sand.u32 %s214, 1
        %s1023 = smul.addr %s1022, 32
        %s1024 = scalar_lea.vmem [#allocation10], %s1023
        // Predicated region
        $region73: #{tpu_custom_call.1} parent=47 // pred_check
          %p1025 = pneg %p224
        $region74: #{tpu_custom_call.1} parent=47 // pred_check_branch
          %1027 = sbr.rel (%p1025) target = $region76
        $region75: #{tpu_custom_call.1} parent=47 // pred_region
          %s1028 = smul.u32 8, %s29
          %s1030 = ssub.s32 512, 512
          %1031 = vsyncadd %s1021, %s1030
          %s1032 = smul.addr %s1028, 64
          %s1033 = scalar_lea.hbm %s7, %s1032
          %s1034 = sshll.u32 %s1024, 4
          %s1035 = int_to_ptr.vmem [resolvable:$true] %s1034
          %1040 = dma.vmem_to_hbm [thread:$0]  %s1035, 512, %s1033, %s1021, 64, 64, 4
        $region76: #{tpu_custom_call.1} parent=47 // pred_fallthru
          _
      $region48: #{tpu_custom_call.1} parent=5 // pred_fallthru
        _
      %p1041 = scmp.le.s32.totalorder 2, %s20
      // Predicated region
      $region77: #{tpu_custom_call.1} parent=5 // pred_check
        %p1042 = pneg %p1041
      $region78: #{tpu_custom_call.1} parent=5 // pred_check_branch
        %1044 = sbr.rel (%p1042) target = $region80
      $region79: #{tpu_custom_call.1} parent=5 // pred_region
        %s1045 = ssub.s32 %s20, 2
        // Predicated region
        $region81: #{tpu_custom_call.1} parent=79 // pred_check
          %p1046 = pneg %p230
        $region82: #{tpu_custom_call.1} parent=79 // pred_check_branch
          %1048 = sbr.rel (%p1046) target = $region84
        $region83: #{tpu_custom_call.1} parent=79 // pred_region
          %s1049 = sand.u32 %s215, 1
          %s1050 = scalar_lea.sflag [#allocation5], %s1049
          %s1051 = sand.u32 %s215, 1
          %s1052 = smul.addr %s1051, 32
          %s1053 = scalar_lea.vmem [#allocation10], %s1052
          %1054 = dma.done %s1050, 512
        $region84: #{tpu_custom_call.1} parent=79 // pred_fallthru
          _
      $region80: #{tpu_custom_call.1} parent=5 // pred_fallthru
        _
    $region6: #{tpu_custom_call.1} parent=1 // loop_footer
      %s24 = sadd.s32 1, %s20
    $region7: #{tpu_custom_call.1} parent=1 // loop_footer_branch
      %19 = sbr.rel target = $region3
    $region8: #{tpu_custom_call.1} parent=1 // loop_exit
      _
    %1055 = vsyncpa [#allocation4], 1
    %s1056 = scalar_lea.sflag [#allocation4], 1
    %1057 = vsyncpa %s1056, 1
    %1058 = vsyncpa [#allocation7], 1
    %1059 = vsyncpa [#allocation5], 1
    %s1060 = scalar_lea.sflag [#allocation5], 1
    %1061 = vsyncpa %s1060, 1

</llo_original>
